<compile_context>
chip_gen: v6e
topology: v6e:2x2x1
jax: 0.10.0
libtpu: 0.0.40
codegen_flags: <defaults>
</compile_context>

<pallas_src>
import functools

import jax
import jax.numpy as jnp
from jax.experimental import pallas as pl
from jax.experimental.pallas import tpu as pltpu


# ----------------------------------------------------------------------------
# Fused Seq2Seq kernel
# ----------------------------------------------------------------------------
def _seq2seq_kernel(*refs, hidden_dim, batch_pad, seq_len, num_layers):
    H = hidden_dim
    Bp = batch_pad
    T = seq_len
    L = num_layers

    # --- unpack refs: inputs, output, scratch ---------------------------------
    n_in = 4 + 6 * L
    src_ref, trg_ref = refs[0], refs[1]
    layer_refs = refs[2:2 + 6 * L]
    fc_w_ref, fc_b_ref = refs[2 + 6 * L], refs[3 + 6 * L]
    y_ref = refs[n_in]
    xg_s, seq_s = refs[n_in + 1], refs[n_in + 2]

    enc = [layer_refs[3 * l: 3 * l + 3] for l in range(L)]
    dec = [layer_refs[3 * (L + l): 3 * (L + l) + 3] for l in range(L)]

    def mx(a, w_ref):
        # cast an f32 activation to the MXU operand dtype of the weights
        return a.astype(w_ref.dtype)

    def run_layer(x_src_ref, w_ih_ref, w_hh_ref, b_ref, h0, c0):
        # 1) hoisted input->gates matmul over the whole sequence (one big MXU op)
        xg_s[...] = (jnp.dot(mx(x_src_ref[...], w_ih_ref), w_ih_ref[...],
                             preferred_element_type=jnp.float32)
                     + b_ref[...])

        # 2) sequential recurrence; h/c live in vregs as fori carries
        def step(t, carry):
            h, c = carry
            row = pl.multiple_of(t * Bp, Bp)
            gates = (xg_s[pl.ds(row, Bp), :]
                     + jnp.dot(mx(h, w_hh_ref), w_hh_ref[...],
                               preferred_element_type=jnp.float32))
            # two full-vreg EUP passes instead of four sub-vreg ones
            sg = jax.nn.sigmoid(gates)
            tg = jnp.tanh(gates)
            i_g = sg[:, 0 * H:1 * H]
            f_g = sg[:, 1 * H:2 * H]
            g_g = tg[:, 2 * H:3 * H]
            o_g = sg[:, 3 * H:4 * H]
            c_new = f_g * c + i_g * g_g
            h_new = o_g * jnp.tanh(c_new)
            seq_s[pl.ds(row, Bp), :] = h_new        # layer output for next layer
            return (h_new, c_new)

        return jax.lax.fori_loop(0, T, step, (h0, c0))

    zeros = jnp.zeros((Bp, H), jnp.float32)

    # --- Encoder: stacked LSTM, zero initial state ----------------------------
    enc_states = []
    x_src = src_ref
    for l in range(L):
        w_ih, w_hh, b = enc[l]
        h_f, c_f = run_layer(x_src, w_ih, w_hh, b, zeros, zeros)
        enc_states.append((h_f, c_f))
        x_src = seq_s          # next layer consumes this layer's output (in VMEM)

    # --- Decoder: stacked LSTM initialized from encoder per-layer final states
    x_src = trg_ref
    for l in range(L):
        w_ih, w_hh, b = dec[l]
        h0, c0 = enc_states[l]
        run_layer(x_src, w_ih, w_hh, b, h0, c0)
        x_src = seq_s

    # --- fc over the whole decoder output sequence (lane-dense padded output) -
    y_ref[...] = (jnp.dot(mx(seq_s[...], fc_w_ref), fc_w_ref[...],
                          preferred_element_type=jnp.float32)
                  + fc_b_ref[...])
    # TODO(synk): nn.LSTM inter-layer dropout(0.5) is training-only; eval semantics used.


# ----------------------------------------------------------------------------
# Parameter construction (deterministic, PyTorch-style U(-1/sqrt(H), 1/sqrt(H)))
# Weights stored transposed vs. PyTorch: w_ih (In, 4H), w_hh (H, 4H),
# gate order (i, f, g, o), combined bias b_ih + b_hh.
# ----------------------------------------------------------------------------
def init_params(key, input_dim, output_dim, hidden_dim, num_layers):
    k = 1.0 / jnp.sqrt(hidden_dim)

    def uniform(key, shape):
        return jax.random.uniform(key, shape, jnp.float32, -k, k)

    def lstm_params(key, in_dim):
        layers = []
        for l in range(num_layers):
            d = in_dim if l == 0 else hidden_dim
            key, k1, k2, k3, k4 = jax.random.split(key, 5)
            layers.append({
                "w_ih": uniform(k1, (d, 4 * hidden_dim)),
                "w_hh": uniform(k2, (hidden_dim, 4 * hidden_dim)),
                "b": uniform(k3, (1, 4 * hidden_dim)) + uniform(k4, (1, 4 * hidden_dim)),
            })
        return key, layers

    key, enc = lstm_params(key, input_dim)
    key, dec = lstm_params(key, output_dim)
    key, kw, kb = jax.random.split(key, 3)
    return {
        "hidden_dim": hidden_dim,
        "num_layers": num_layers,
        "enc": enc,
        "dec": dec,
        "fc_w": uniform(kw, (hidden_dim, output_dim)),
        "fc_b": uniform(kb, (output_dim,)),
    }


# ----------------------------------------------------------------------------
# Seq2Seq forward wrapper
# ----------------------------------------------------------------------------
def seq2seq_forward(params, src_btf, trg_btf, *, mxu_dtype=jnp.bfloat16):
    # src_btf: (B, T, input_dim), trg_btf: (B, T, output_dim), batch_first.
    B, T, _ = src_btf.shape
    Out = trg_btf.shape[2]
    H = params["hidden_dim"]
    L = params["num_layers"]

    Bp = max(8, ((B + 7) // 8) * 8)            # pad batch to a sublane multiple
    Opad = max(128, ((Out + 127) // 128) * 128)  # lane-dense fc output

    def to_time_major_2d(x):                    # (B,T,F) -> (T*Bp, F)
        if Bp != B:
            x = jnp.pad(x, ((0, Bp - B), (0, 0), (0, 0)))
        x = jnp.transpose(x, (1, 0, 2))
        return x.reshape(T * Bp, x.shape[-1])

    src2d = to_time_major_2d(src_btf.astype(jnp.float32))
    trg2d = to_time_major_2d(trg_btf.astype(jnp.float32))

    # Weights -> MXU dtype (bf16 by default); biases / state stay f32.
    weights = []
    for stack in ("enc", "dec"):
        for l in range(L):
            p = params[stack][l]
            weights += [p["w_ih"].astype(mxu_dtype),
                        p["w_hh"].astype(mxu_dtype),
                        p["b"].astype(jnp.float32)]
    fc_w = jnp.zeros((H, Opad), mxu_dtype).at[:, :Out].set(
        params["fc_w"].astype(mxu_dtype))
    fc_b = jnp.zeros((1, Opad), jnp.float32).at[:, :Out].set(
        params["fc_b"].reshape(1, Out))

    kernel = functools.partial(_seq2seq_kernel, hidden_dim=H, batch_pad=Bp,
                               seq_len=T, num_layers=L)

    y2d = pl.pallas_call(
        kernel,
        out_shape=jax.ShapeDtypeStruct((T * Bp, Opad), jnp.float32),
        scratch_shapes=[
            pltpu.VMEM((T * Bp, 4 * H), jnp.float32),  # hoisted input-gate buffer
            pltpu.VMEM((T * Bp, H), jnp.float32),      # inter-layer sequence buffer
        ],
    )(src2d, trg2d, *weights, fc_w, fc_b)

    y = y2d.reshape(T, Bp, Opad)[:, :B, :Out]
    return jnp.transpose(y, (1, 0, 2))          # back to (B, T, output_dim)


if __name__ == "__main__":
    # Small shapes consistent with the module: batch=2, seq=8,
    # speech (encoder input) dim=4, joint (decoder in/out) dim=6, hidden=32, 2 layers.
    B, T = 2, 8
    input_dim, output_dim = 4, 6
    hidden_dim, num_layers = 32, 2

    key = jax.random.PRNGKey(0)
    kp, ks, kt = jax.random.split(key, 3)

    params = init_params(kp, input_dim, output_dim, hidden_dim, num_layers)
    src = jax.random.normal(ks, (B, T, input_dim), jnp.float32)
    trg = jax.random.normal(kt, (B, T, output_dim), jnp.float32)

    out = seq2seq_forward(params, src, trg)
    out = jax.block_until_ready(out)
    assert out.shape == (B, T, output_dim), out.shape
    print("KERNEL_OK")
</pallas_src>

<mosaic_0001>
module attributes {stable_mosaic.version = 11 : i64} {
  func.func @_seq2seq_kernel(%arg0: memref<64x4xf32, #tpu.memory_space<vmem>>, %arg1: memref<64x6xf32, #tpu.memory_space<vmem>>, %arg2: memref<4x128xbf16, #tpu.memory_space<vmem>>, %arg3: memref<32x128xbf16, #tpu.memory_space<vmem>>, %arg4: memref<1x128xf32, #tpu.memory_space<vmem>>, %arg5: memref<32x128xbf16, #tpu.memory_space<vmem>>, %arg6: memref<32x128xbf16, #tpu.memory_space<vmem>>, %arg7: memref<1x128xf32, #tpu.memory_space<vmem>>, %arg8: memref<6x128xbf16, #tpu.memory_space<vmem>>, %arg9: memref<32x128xbf16, #tpu.memory_space<vmem>>, %arg10: memref<1x128xf32, #tpu.memory_space<vmem>>, %arg11: memref<32x128xbf16, #tpu.memory_space<vmem>>, %arg12: memref<32x128xbf16, #tpu.memory_space<vmem>>, %arg13: memref<1x128xf32, #tpu.memory_space<vmem>>, %arg14: memref<32x128xbf16, #tpu.memory_space<vmem>>, %arg15: memref<1x128xf32, #tpu.memory_space<vmem>>, %arg16: memref<64x128xf32, #tpu.memory_space<vmem>>, %arg17: memref<64x128xf32, #tpu.memory_space<vmem>>, %arg18: memref<64x32xf32, #tpu.memory_space<vmem>>) attributes {dimension_semantics = [], scalar_prefetch = 0 : i64, scratch_operands = 2 : i64, tpu.core_type = #tpu.core_type<tc>} {
    %cst = arith.constant 0.000000e+00 : f32
    %0 = vector.broadcast %cst : f32 to vector<8x32xf32>
    %c0 = arith.constant 0 : index
    %c0_0 = arith.constant 0 : index
    %1 = vector.load %arg0[%c0, %c0_0] : memref<64x4xf32, #tpu.memory_space<vmem>>, vector<64x4xf32>
    %2 = arith.truncf %1 : vector<64x4xf32> to vector<64x4xbf16>
    %c0_1 = arith.constant 0 : index
    %c0_2 = arith.constant 0 : index
    %3 = vector.load %arg2[%c0_1, %c0_2] : memref<4x128xbf16, #tpu.memory_space<vmem>>, vector<4x128xbf16>
    %cst_3 = arith.constant dense<0.000000e+00> : vector<64x128xf32>
    %4 = tpu.matmul %2, %3, %cst_3 {dimension_numbers = #tpu.dot_dimension_numbers<[1], [0], [0], [1], [0, 0, 1, 1], [], []>} : vector<64x4xbf16>, vector<4x128xbf16>, vector<64x128xf32> -> vector<64x128xf32>
    %c0_4 = arith.constant 0 : index
    %c0_5 = arith.constant 0 : index
    %5 = vector.load %arg4[%c0_4, %c0_5] : memref<1x128xf32, #tpu.memory_space<vmem>>, vector<1x128xf32>
    %6 = vector.broadcast %5 : vector<1x128xf32> to vector<64x128xf32>
    %7 = arith.addf %4, %6 : vector<64x128xf32>
    %c0_6 = arith.constant 0 : index
    %c0_7 = arith.constant 0 : index
    %8 = vector.load %arg17[%c0_6, %c0_7] : memref<64x128xf32, #tpu.memory_space<vmem>>, vector<64x128xf32>
    tpu.vector_store %arg17[%c0_6, %c0_7], %7 {strides = array<i32>} : memref<64x128xf32, #tpu.memory_space<vmem>>, vector<64x128xf32>,
    %c0_i32 = arith.constant 0 : i32
    %c8_i32 = arith.constant 8 : i32
    %9 = arith.addi %c0_i32, %c8_i32 : i32
    %c1_i32 = arith.constant 1 : i32
    %10:2 = scf.for %arg19 = %c0_i32 to %9 step %c1_i32 iter_args(%arg20 = %0, %arg21 = %0) -> (vector<8x32xf32>, vector<8x32xf32>)  : i32 {
      %c8_i32_57 = arith.constant 8 : i32
      %49 = arith.muli %arg19, %c8_i32_57 : i32
      %50 = tpu.assume_multiple %49, 8 : i32
      %51 = arith.index_cast %50 : i32 to index
      %c0_58 = arith.constant 0 : index
      %52 = vector.load %arg17[%51, %c0_58] : memref<64x128xf32, #tpu.memory_space<vmem>>, vector<8x128xf32>
      %53 = arith.truncf %arg20 : vector<8x32xf32> to vector<8x32xbf16>
      %c0_59 = arith.constant 0 : index
      %c0_60 = arith.constant 0 : index
      %54 = vector.load %arg3[%c0_59, %c0_60] : memref<32x128xbf16, #tpu.memory_space<vmem>>, vector<32x128xbf16>
      %cst_61 = arith.constant dense<0.000000e+00> : vector<8x128xf32>
      %55 = tpu.matmul %53, %54, %cst_61 {dimension_numbers = #tpu.dot_dimension_numbers<[1], [0], [0], [1], [0, 0, 1, 1], [], []>} : vector<8x32xbf16>, vector<32x128xbf16>, vector<8x128xf32> -> vector<8x128xf32>
      %56 = arith.addf %52, %55 : vector<8x128xf32>
      %57 = arith.negf %56 : vector<8x128xf32>
      %58 = math.exp %57 : vector<8x128xf32>
      %cst_62 = arith.constant 1.000000e+00 : f32
      %59 = vector.broadcast %cst_62 : f32 to vector<8x128xf32>
      %60 = arith.addf %59, %58 : vector<8x128xf32>
      %61 = arith.divf %59, %60 : vector<8x128xf32>
      %62 = math.tanh %56 : vector<8x128xf32>
      %63 = vector.extract_strided_slice %61 {offsets = [0, 0], sizes = [8, 32], strides = [1, 1]} : vector<8x128xf32> to vector<8x32xf32>
      %64 = vector.extract_strided_slice %61 {offsets = [0, 32], sizes = [8, 32], strides = [1, 1]} : vector<8x128xf32> to vector<8x32xf32>
      %65 = vector.extract_strided_slice %62 {offsets = [0, 64], sizes = [8, 32], strides = [1, 1]} : vector<8x128xf32> to vector<8x32xf32>
      %66 = vector.extract_strided_slice %61 {offsets = [0, 96], sizes = [8, 32], strides = [1, 1]} : vector<8x128xf32> to vector<8x32xf32>
      %67 = arith.mulf %64, %arg21 : vector<8x32xf32>
      %68 = arith.mulf %63, %65 : vector<8x32xf32>
      %69 = arith.addf %67, %68 : vector<8x32xf32>
      %70 = math.tanh %69 : vector<8x32xf32>
      %71 = arith.mulf %66, %70 : vector<8x32xf32>
      %72 = arith.index_cast %50 : i32 to index
      %c0_63 = arith.constant 0 : index
      %73 = vector.load %arg18[%72, %c0_63] : memref<64x32xf32, #tpu.memory_space<vmem>>, vector<8x32xf32>
      tpu.vector_store %arg18[%72, %c0_63], %71 {strides = array<i32>} : memref<64x32xf32, #tpu.memory_space<vmem>>, vector<8x32xf32>,
      scf.yield %71, %69 : vector<8x32xf32>, vector<8x32xf32>
    }
    %c8_i32_8 = arith.constant 8 : i32
    %c0_9 = arith.constant 0 : index
    %c0_10 = arith.constant 0 : index
    %11 = vector.load %arg18[%c0_9, %c0_10] : memref<64x32xf32, #tpu.memory_space<vmem>>, vector<64x32xf32>
    %12 = arith.truncf %11 : vector<64x32xf32> to vector<64x32xbf16>
    %c0_11 = arith.constant 0 : index
    %c0_12 = arith.constant 0 : index
    %13 = vector.load %arg5[%c0_11, %c0_12] : memref<32x128xbf16, #tpu.memory_space<vmem>>, vector<32x128xbf16>
    %cst_13 = arith.constant dense<0.000000e+00> : vector<64x128xf32>
    %14 = tpu.matmul %12, %13, %cst_13 {dimension_numbers = #tpu.dot_dimension_numbers<[1], [0], [0], [1], [0, 0, 1, 1], [], []>} : vector<64x32xbf16>, vector<32x128xbf16>, vector<64x128xf32> -> vector<64x128xf32>
    %c0_14 = arith.constant 0 : index
    %c0_15 = arith.constant 0 : index
    %15 = vector.load %arg7[%c0_14, %c0_15] : memref<1x128xf32, #tpu.memory_space<vmem>>, vector<1x128xf32>
    %16 = vector.broadcast %15 : vector<1x128xf32> to vector<64x128xf32>
    %17 = arith.addf %14, %16 : vector<64x128xf32>
    %c0_16 = arith.constant 0 : index
    %c0_17 = arith.constant 0 : index
    %18 = vector.load %arg17[%c0_16, %c0_17] : memref<64x128xf32, #tpu.memory_space<vmem>>, vector<64x128xf32>
    tpu.vector_store %arg17[%c0_16, %c0_17], %17 {strides = array<i32>} : memref<64x128xf32, #tpu.memory_space<vmem>>, vector<64x128xf32>,
    %c0_i32_18 = arith.constant 0 : i32
    %c8_i32_19 = arith.constant 8 : i32
    %19 = arith.addi %c0_i32_18, %c8_i32_19 : i32
    %c1_i32_20 = arith.constant 1 : i32
    %20:2 = scf.for %arg19 = %c0_i32_18 to %19 step %c1_i32_20 iter_args(%arg20 = %0, %arg21 = %0) -> (vector<8x32xf32>, vector<8x32xf32>)  : i32 {
      %c8_i32_57 = arith.constant 8 : i32
      %49 = arith.muli %arg19, %c8_i32_57 : i32
      %50 = tpu.assume_multiple %49, 8 : i32
      %51 = arith.index_cast %50 : i32 to index
      %c0_58 = arith.constant 0 : index
      %52 = vector.load %arg17[%51, %c0_58] : memref<64x128xf32, #tpu.memory_space<vmem>>, vector<8x128xf32>
      %53 = arith.truncf %arg20 : vector<8x32xf32> to vector<8x32xbf16>
      %c0_59 = arith.constant 0 : index
      %c0_60 = arith.constant 0 : index
      %54 = vector.load %arg6[%c0_59, %c0_60] : memref<32x128xbf16, #tpu.memory_space<vmem>>, vector<32x128xbf16>
      %cst_61 = arith.constant dense<0.000000e+00> : vector<8x128xf32>
      %55 = tpu.matmul %53, %54, %cst_61 {dimension_numbers = #tpu.dot_dimension_numbers<[1], [0], [0], [1], [0, 0, 1, 1], [], []>} : vector<8x32xbf16>, vector<32x128xbf16>, vector<8x128xf32> -> vector<8x128xf32>
      %56 = arith.addf %52, %55 : vector<8x128xf32>
      %57 = arith.negf %56 : vector<8x128xf32>
      %58 = math.exp %57 : vector<8x128xf32>
      %cst_62 = arith.constant 1.000000e+00 : f32
      %59 = vector.broadcast %cst_62 : f32 to vector<8x128xf32>
      %60 = arith.addf %59, %58 : vector<8x128xf32>
      %61 = arith.divf %59, %60 : vector<8x128xf32>
      %62 = math.tanh %56 : vector<8x128xf32>
      %63 = vector.extract_strided_slice %61 {offsets = [0, 0], sizes = [8, 32], strides = [1, 1]} : vector<8x128xf32> to vector<8x32xf32>
      %64 = vector.extract_strided_slice %61 {offsets = [0, 32], sizes = [8, 32], strides = [1, 1]} : vector<8x128xf32> to vector<8x32xf32>
      %65 = vector.extract_strided_slice %62 {offsets = [0, 64], sizes = [8, 32], strides = [1, 1]} : vector<8x128xf32> to vector<8x32xf32>
      %66 = vector.extract_strided_slice %61 {offsets = [0, 96], sizes = [8, 32], strides = [1, 1]} : vector<8x128xf32> to vector<8x32xf32>
      %67 = arith.mulf %64, %arg21 : vector<8x32xf32>
      %68 = arith.mulf %63, %65 : vector<8x32xf32>
      %69 = arith.addf %67, %68 : vector<8x32xf32>
      %70 = math.tanh %69 : vector<8x32xf32>
      %71 = arith.mulf %66, %70 : vector<8x32xf32>
      %72 = arith.index_cast %50 : i32 to index
      %c0_63 = arith.constant 0 : index
      %73 = vector.load %arg18[%72, %c0_63] : memref<64x32xf32, #tpu.memory_space<vmem>>, vector<8x32xf32>
      tpu.vector_store %arg18[%72, %c0_63], %71 {strides = array<i32>} : memref<64x32xf32, #tpu.memory_space<vmem>>, vector<8x32xf32>,
      scf.yield %71, %69 : vector<8x32xf32>, vector<8x32xf32>
    }
    %c8_i32_21 = arith.constant 8 : i32
    %c0_22 = arith.constant 0 : index
    %c0_23 = arith.constant 0 : index
    %21 = vector.load %arg1[%c0_22, %c0_23] : memref<64x6xf32, #tpu.memory_space<vmem>>, vector<64x6xf32>
    %22 = arith.truncf %21 : vector<64x6xf32> to vector<64x6xbf16>
    %c0_24 = arith.constant 0 : index
    %c0_25 = arith.constant 0 : index
    %23 = vector.load %arg8[%c0_24, %c0_25] : memref<6x128xbf16, #tpu.memory_space<vmem>>, vector<6x128xbf16>
    %cst_26 = arith.constant dense<0.000000e+00> : vector<64x128xf32>
    %24 = tpu.matmul %22, %23, %cst_26 {dimension_numbers = #tpu.dot_dimension_numbers<[1], [0], [0], [1], [0, 0, 1, 1], [], []>} : vector<64x6xbf16>, vector<6x128xbf16>, vector<64x128xf32> -> vector<64x128xf32>
    %c0_27 = arith.constant 0 : index
    %c0_28 = arith.constant 0 : index
    %25 = vector.load %arg10[%c0_27, %c0_28] : memref<1x128xf32, #tpu.memory_space<vmem>>, vector<1x128xf32>
    %26 = vector.broadcast %25 : vector<1x128xf32> to vector<64x128xf32>
    %27 = arith.addf %24, %26 : vector<64x128xf32>
    %c0_29 = arith.constant 0 : index
    %c0_30 = arith.constant 0 : index
    %28 = vector.load %arg17[%c0_29, %c0_30] : memref<64x128xf32, #tpu.memory_space<vmem>>, vector<64x128xf32>
    tpu.vector_store %arg17[%c0_29, %c0_30], %27 {strides = array<i32>} : memref<64x128xf32, #tpu.memory_space<vmem>>, vector<64x128xf32>,
    %c0_i32_31 = arith.constant 0 : i32
    %c8_i32_32 = arith.constant 8 : i32
    %29 = arith.addi %c0_i32_31, %c8_i32_32 : i32
    %c1_i32_33 = arith.constant 1 : i32
    %30:2 = scf.for %arg19 = %c0_i32_31 to %29 step %c1_i32_33 iter_args(%arg20 = %10#0, %arg21 = %10#1) -> (vector<8x32xf32>, vector<8x32xf32>)  : i32 {
      %c8_i32_57 = arith.constant 8 : i32
      %49 = arith.muli %arg19, %c8_i32_57 : i32
      %50 = tpu.assume_multiple %49, 8 : i32
      %51 = arith.index_cast %50 : i32 to index
      %c0_58 = arith.constant 0 : index
      %52 = vector.load %arg17[%51, %c0_58] : memref<64x128xf32, #tpu.memory_space<vmem>>, vector<8x128xf32>
      %53 = arith.truncf %arg20 : vector<8x32xf32> to vector<8x32xbf16>
      %c0_59 = arith.constant 0 : index
      %c0_60 = arith.constant 0 : index
      %54 = vector.load %arg9[%c0_59, %c0_60] : memref<32x128xbf16, #tpu.memory_space<vmem>>, vector<32x128xbf16>
      %cst_61 = arith.constant dense<0.000000e+00> : vector<8x128xf32>
      %55 = tpu.matmul %53, %54, %cst_61 {dimension_numbers = #tpu.dot_dimension_numbers<[1], [0], [0], [1], [0, 0, 1, 1], [], []>} : vector<8x32xbf16>, vector<32x128xbf16>, vector<8x128xf32> -> vector<8x128xf32>
      %56 = arith.addf %52, %55 : vector<8x128xf32>
      %57 = arith.negf %56 : vector<8x128xf32>
      %58 = math.exp %57 : vector<8x128xf32>
      %cst_62 = arith.constant 1.000000e+00 : f32
      %59 = vector.broadcast %cst_62 : f32 to vector<8x128xf32>
      %60 = arith.addf %59, %58 : vector<8x128xf32>
      %61 = arith.divf %59, %60 : vector<8x128xf32>
      %62 = math.tanh %56 : vector<8x128xf32>
      %63 = vector.extract_strided_slice %61 {offsets = [0, 0], sizes = [8, 32], strides = [1, 1]} : vector<8x128xf32> to vector<8x32xf32>
      %64 = vector.extract_strided_slice %61 {offsets = [0, 32], sizes = [8, 32], strides = [1, 1]} : vector<8x128xf32> to vector<8x32xf32>
      %65 = vector.extract_strided_slice %62 {offsets = [0, 64], sizes = [8, 32], strides = [1, 1]} : vector<8x128xf32> to vector<8x32xf32>
      %66 = vector.extract_strided_slice %61 {offsets = [0, 96], sizes = [8, 32], strides = [1, 1]} : vector<8x128xf32> to vector<8x32xf32>
      %67 = arith.mulf %64, %arg21 : vector<8x32xf32>
      %68 = arith.mulf %63, %65 : vector<8x32xf32>
      %69 = arith.addf %67, %68 : vector<8x32xf32>
      %70 = math.tanh %69 : vector<8x32xf32>
      %71 = arith.mulf %66, %70 : vector<8x32xf32>
      %72 = arith.index_cast %50 : i32 to index
      %c0_63 = arith.constant 0 : index
      %73 = vector.load %arg18[%72, %c0_63] : memref<64x32xf32, #tpu.memory_space<vmem>>, vector<8x32xf32>
      tpu.vector_store %arg18[%72, %c0_63], %71 {strides = array<i32>} : memref<64x32xf32, #tpu.memory_space<vmem>>, vector<8x32xf32>,
      scf.yield %71, %69 : vector<8x32xf32>, vector<8x32xf32>
    }
    %c8_i32_34 = arith.constant 8 : i32
    %c0_35 = arith.constant 0 : index
    %c0_36 = arith.constant 0 : index
    %31 = vector.load %arg18[%c0_35, %c0_36] : memref<64x32xf32, #tpu.memory_space<vmem>>, vector<64x32xf32>
    %32 = arith.truncf %31 : vector<64x32xf32> to vector<64x32xbf16>
    %c0_37 = arith.constant 0 : index
    %c0_38 = arith.constant 0 : index
    %33 = vector.load %arg11[%c0_37, %c0_38] : memref<32x128xbf16, #tpu.memory_space<vmem>>, vector<32x128xbf16>
    %cst_39 = arith.constant dense<0.000000e+00> : vector<64x128xf32>
    %34 = tpu.matmul %32, %33, %cst_39 {dimension_numbers = #tpu.dot_dimension_numbers<[1], [0], [0], [1], [0, 0, 1, 1], [], []>} : vector<64x32xbf16>, vector<32x128xbf16>, vector<64x128xf32> -> vector<64x128xf32>
    %c0_40 = arith.constant 0 : index
    %c0_41 = arith.constant 0 : index
    %35 = vector.load %arg13[%c0_40, %c0_41] : memref<1x128xf32, #tpu.memory_space<vmem>>, vector<1x128xf32>
    %36 = vector.broadcast %35 : vector<1x128xf32> to vector<64x128xf32>
    %37 = arith.addf %34, %36 : vector<64x128xf32>
    %c0_42 = arith.constant 0 : index
    %c0_43 = arith.constant 0 : index
    %38 = vector.load %arg17[%c0_42, %c0_43] : memref<64x128xf32, #tpu.memory_space<vmem>>, vector<64x128xf32>
    tpu.vector_store %arg17[%c0_42, %c0_43], %37 {strides = array<i32>} : memref<64x128xf32, #tpu.memory_space<vmem>>, vector<64x128xf32>,
    %c0_i32_44 = arith.constant 0 : i32
    %c8_i32_45 = arith.constant 8 : i32
    %39 = arith.addi %c0_i32_44, %c8_i32_45 : i32
    %c1_i32_46 = arith.constant 1 : i32
    %40:2 = scf.for %arg19 = %c0_i32_44 to %39 step %c1_i32_46 iter_args(%arg20 = %20#0, %arg21 = %20#1) -> (vector<8x32xf32>, vector<8x32xf32>)  : i32 {
      %c8_i32_57 = arith.constant 8 : i32
      %49 = arith.muli %arg19, %c8_i32_57 : i32
      %50 = tpu.assume_multiple %49, 8 : i32
      %51 = arith.index_cast %50 : i32 to index
      %c0_58 = arith.constant 0 : index
      %52 = vector.load %arg17[%51, %c0_58] : memref<64x128xf32, #tpu.memory_space<vmem>>, vector<8x128xf32>
      %53 = arith.truncf %arg20 : vector<8x32xf32> to vector<8x32xbf16>
      %c0_59 = arith.constant 0 : index
      %c0_60 = arith.constant 0 : index
      %54 = vector.load %arg12[%c0_59, %c0_60] : memref<32x128xbf16, #tpu.memory_space<vmem>>, vector<32x128xbf16>
      %cst_61 = arith.constant dense<0.000000e+00> : vector<8x128xf32>
      %55 = tpu.matmul %53, %54, %cst_61 {dimension_numbers = #tpu.dot_dimension_numbers<[1], [0], [0], [1], [0, 0, 1, 1], [], []>} : vector<8x32xbf16>, vector<32x128xbf16>, vector<8x128xf32> -> vector<8x128xf32>
      %56 = arith.addf %52, %55 : vector<8x128xf32>
      %57 = arith.negf %56 : vector<8x128xf32>
      %58 = math.exp %57 : vector<8x128xf32>
      %cst_62 = arith.constant 1.000000e+00 : f32
      %59 = vector.broadcast %cst_62 : f32 to vector<8x128xf32>
      %60 = arith.addf %59, %58 : vector<8x128xf32>
      %61 = arith.divf %59, %60 : vector<8x128xf32>
      %62 = math.tanh %56 : vector<8x128xf32>
      %63 = vector.extract_strided_slice %61 {offsets = [0, 0], sizes = [8, 32], strides = [1, 1]} : vector<8x128xf32> to vector<8x32xf32>
      %64 = vector.extract_strided_slice %61 {offsets = [0, 32], sizes = [8, 32], strides = [1, 1]} : vector<8x128xf32> to vector<8x32xf32>
      %65 = vector.extract_strided_slice %62 {offsets = [0, 64], sizes = [8, 32], strides = [1, 1]} : vector<8x128xf32> to vector<8x32xf32>
      %66 = vector.extract_strided_slice %61 {offsets = [0, 96], sizes = [8, 32], strides = [1, 1]} : vector<8x128xf32> to vector<8x32xf32>
      %67 = arith.mulf %64, %arg21 : vector<8x32xf32>
      %68 = arith.mulf %63, %65 : vector<8x32xf32>
      %69 = arith.addf %67, %68 : vector<8x32xf32>
      %70 = math.tanh %69 : vector<8x32xf32>
      %71 = arith.mulf %66, %70 : vector<8x32xf32>
      %72 = arith.index_cast %50 : i32 to index
      %c0_63 = arith.constant 0 : index
      %73 = vector.load %arg18[%72, %c0_63] : memref<64x32xf32, #tpu.memory_space<vmem>>, vector<8x32xf32>
      tpu.vector_store %arg18[%72, %c0_63], %71 {strides = array<i32>} : memref<64x32xf32, #tpu.memory_space<vmem>>, vector<8x32xf32>,
      scf.yield %71, %69 : vector<8x32xf32>, vector<8x32xf32>
    }
    %c8_i32_47 = arith.constant 8 : i32
    %c0_48 = arith.constant 0 : index
    %c0_49 = arith.constant 0 : index
    %41 = vector.load %arg18[%c0_48, %c0_49] : memref<64x32xf32, #tpu.memory_space<vmem>>, vector<64x32xf32>
    %42 = arith.truncf %41 : vector<64x32xf32> to vector<64x32xbf16>
    %c0_50 = arith.constant 0 : index
    %c0_51 = arith.constant 0 : index
    %43 = vector.load %arg14[%c0_50, %c0_51] : memref<32x128xbf16, #tpu.memory_space<vmem>>, vector<32x128xbf16>
    %cst_52 = arith.constant dense<0.000000e+00> : vector<64x128xf32>
    %44 = tpu.matmul %42, %43, %cst_52 {dimension_numbers = #tpu.dot_dimension_numbers<[1], [0], [0], [1], [0, 0, 1, 1], [], []>} : vector<64x32xbf16>, vector<32x128xbf16>, vector<64x128xf32> -> vector<64x128xf32>
    %c0_53 = arith.constant 0 : index
    %c0_54 = arith.constant 0 : index
    %45 = vector.load %arg15[%c0_53, %c0_54] : memref<1x128xf32, #tpu.memory_space<vmem>>, vector<1x128xf32>
    %46 = vector.broadcast %45 : vector<1x128xf32> to vector<64x128xf32>
    %47 = arith.addf %44, %46 : vector<64x128xf32>
    %c0_55 = arith.constant 0 : index
    %c0_56 = arith.constant 0 : index
    %48 = vector.load %arg16[%c0_55, %c0_56] : memref<64x128xf32, #tpu.memory_space<vmem>>, vector<64x128xf32>
    tpu.vector_store %arg16[%c0_55, %c0_56], %47 {strides = array<i32>} : memref<64x128xf32, #tpu.memory_space<vmem>>, vector<64x128xf32>,
    return
  }
}

</mosaic_0001>

<llo_original>
// kernel: tpu_custom_call.1
$region0: #{tpu_custom_call.1}
  #allocation0 [shape = 'u32[]', space=smem, size = 0x4, offset = 0x4, fixed_abs, tag = 'smem constant byte address 0x4 - core index']
  #allocation1 [shape = 'u32[144,128]{1,0:T(1,128)}', space=vmem, size = 0x12000, scoped, tag = 'internal scratch']
  #allocation2 [shape = 'f32[64,128]{1,0:T(8,128)}', space=vmem, size = 0x8000, scoped, tag = 'scratch operand']
  #allocation3 [shape = 'f32[64,32]{1,0:T(8,128)}', space=vmem, size = 0x8000, scoped, tag = 'scratch operand']
  %s0 = inlined_call_operand.vmem [shape: f32[64,4], index: 0, kind: input, shape index: {}]
  %s1 = inlined_call_operand.vmem [shape: f32[64,6], index: 1, kind: input, shape index: {}]
  %s2 = inlined_call_operand.vmem [shape: bf16[4,128], index: 2, kind: input, shape index: {}]
  %s3 = inlined_call_operand.vmem [shape: bf16[32,128], index: 3, kind: input, shape index: {}]
  %s4 = inlined_call_operand.vmem [shape: f32[1,128], index: 4, kind: input, shape index: {}]
  %s5 = inlined_call_operand.vmem [shape: bf16[32,128], index: 5, kind: input, shape index: {}]
  %s6 = inlined_call_operand.vmem [shape: bf16[32,128], index: 6, kind: input, shape index: {}]
  %s7 = inlined_call_operand.vmem [shape: f32[1,128], index: 7, kind: input, shape index: {}]
  %s8 = inlined_call_operand.vmem [shape: bf16[6,128], index: 8, kind: input, shape index: {}]
  %s9 = inlined_call_operand.vmem [shape: bf16[32,128], index: 9, kind: input, shape index: {}]
  %s10 = inlined_call_operand.vmem [shape: f32[1,128], index: 10, kind: input, shape index: {}]
  %s11 = inlined_call_operand.vmem [shape: bf16[32,128], index: 11, kind: input, shape index: {}]
  %s12 = inlined_call_operand.vmem [shape: bf16[32,128], index: 12, kind: input, shape index: {}]
  %s13 = inlined_call_operand.vmem [shape: f32[1,128], index: 13, kind: input, shape index: {}]
  %s14 = inlined_call_operand.vmem [shape: bf16[32,128], index: 14, kind: input, shape index: {}]
  %s15 = inlined_call_operand.vmem [shape: f32[1,128], index: 15, kind: input, shape index: {}]
  %s16 = inlined_call_operand.hbm [shape: f32[64,128], index: 16, kind: output, shape index: {}]
  %s17 = sld [smem:[#allocation0]]
  $region102: #{tpu_custom_call.1} parent=0
    _
  %s19 = ssub.s32 1, %s17
  %s20 = scalar_select 0, %s19, %s17
  $region1: #{tpu_custom_call.1} parent=0
    #allocation4 [shape = 'u8[32768]{0}', space=vmem, size = 0x8000, scoped, tag = 'output window, operand 0, single buffered']
    #allocation5 [shape = 's32[1]{0}', space=sflag, size = 0x4, scoped, tag = 'scoped memory for tpu_custom_call.1']
    %21 = vsyncpa [#allocation5], 0
    // Predicated region
    $region2: #{tpu_custom_call.1} parent=1 // pred_check
      _
    $region3: #{tpu_custom_call.1} parent=1 // pred_check_branch
      %23 = sbr.rel (0) target = $region5
    $region4: #{tpu_custom_call.1} parent=1 // pred_region
      _
    $region5: #{tpu_custom_call.1} parent=1 // pred_fallthru
      _
    // Predicated region
    $region6: #{tpu_custom_call.1} parent=1 // pred_check
      _
    $region7: #{tpu_custom_call.1} parent=1 // pred_check_branch
      %25 = sbr.rel (0) target = $region9
    $region8: #{tpu_custom_call.1} parent=1 // pred_region
      _
    $region9: #{tpu_custom_call.1} parent=1 // pred_fallthru
      _
    // Predicated region
    $region10: #{tpu_custom_call.1} parent=1 // pred_check
      _
    $region11: #{tpu_custom_call.1} parent=1 // pred_check_branch
      %27 = sbr.rel (0) target = $region13
    $region12: #{tpu_custom_call.1} parent=1 // pred_region
      _
    $region13: #{tpu_custom_call.1} parent=1 // pred_fallthru
      _
    // Predicated region
    $region14: #{tpu_custom_call.1} parent=1 // pred_check
      _
    $region15: #{tpu_custom_call.1} parent=1 // pred_check_branch
      %29 = sbr.rel (0) target = $region17
    $region16: #{tpu_custom_call.1} parent=1 // pred_region
      _
    $region17: #{tpu_custom_call.1} parent=1 // pred_fallthru
      _
    // Predicated region
    $region18: #{tpu_custom_call.1} parent=1 // pred_check
      _
    $region19: #{tpu_custom_call.1} parent=1 // pred_check_branch
      %31 = sbr.rel (0) target = $region21
    $region20: #{tpu_custom_call.1} parent=1 // pred_region
      _
    $region21: #{tpu_custom_call.1} parent=1 // pred_fallthru
      _
    // Predicated region
    $region22: #{tpu_custom_call.1} parent=1 // pred_check
      _
    $region23: #{tpu_custom_call.1} parent=1 // pred_check_branch
      %33 = sbr.rel (0) target = $region25
    $region24: #{tpu_custom_call.1} parent=1 // pred_region
      _
    $region25: #{tpu_custom_call.1} parent=1 // pred_fallthru
      _
    // Predicated region
    $region26: #{tpu_custom_call.1} parent=1 // pred_check
      _
    $region27: #{tpu_custom_call.1} parent=1 // pred_check_branch
      %35 = sbr.rel (0) target = $region29
    $region28: #{tpu_custom_call.1} parent=1 // pred_region
      _
    $region29: #{tpu_custom_call.1} parent=1 // pred_fallthru
      _
    // Predicated region
    $region30: #{tpu_custom_call.1} parent=1 // pred_check
      _
    $region31: #{tpu_custom_call.1} parent=1 // pred_check_branch
      %37 = sbr.rel (0) target = $region33
    $region32: #{tpu_custom_call.1} parent=1 // pred_region
      _
    $region33: #{tpu_custom_call.1} parent=1 // pred_fallthru
      _
    // Predicated region
    $region34: #{tpu_custom_call.1} parent=1 // pred_check
      _
    $region35: #{tpu_custom_call.1} parent=1 // pred_check_branch
      %39 = sbr.rel (0) target = $region37
    $region36: #{tpu_custom_call.1} parent=1 // pred_region
      _
    $region37: #{tpu_custom_call.1} parent=1 // pred_fallthru
      _
    // Predicated region
    $region38: #{tpu_custom_call.1} parent=1 // pred_check
      _
    $region39: #{tpu_custom_call.1} parent=1 // pred_check_branch
      %41 = sbr.rel (0) target = $region41
    $region40: #{tpu_custom_call.1} parent=1 // pred_region
      _
    $region41: #{tpu_custom_call.1} parent=1 // pred_fallthru
      _
    // Predicated region
    $region42: #{tpu_custom_call.1} parent=1 // pred_check
      _
    $region43: #{tpu_custom_call.1} parent=1 // pred_check_branch
      %43 = sbr.rel (0) target = $region45
    $region44: #{tpu_custom_call.1} parent=1 // pred_region
      _
    $region45: #{tpu_custom_call.1} parent=1 // pred_fallthru
      _
    // Predicated region
    $region46: #{tpu_custom_call.1} parent=1 // pred_check
      _
    $region47: #{tpu_custom_call.1} parent=1 // pred_check_branch
      %45 = sbr.rel (0) target = $region49
    $region48: #{tpu_custom_call.1} parent=1 // pred_region
      _
    $region49: #{tpu_custom_call.1} parent=1 // pred_fallthru
      _
    // Predicated region
    $region50: #{tpu_custom_call.1} parent=1 // pred_check
      _
    $region51: #{tpu_custom_call.1} parent=1 // pred_check_branch
      %47 = sbr.rel (0) target = $region53
    $region52: #{tpu_custom_call.1} parent=1 // pred_region
      _
    $region53: #{tpu_custom_call.1} parent=1 // pred_fallthru
      _
    // Predicated region
    $region54: #{tpu_custom_call.1} parent=1 // pred_check
      _
    $region55: #{tpu_custom_call.1} parent=1 // pred_check_branch
      %49 = sbr.rel (0) target = $region57
    $region56: #{tpu_custom_call.1} parent=1 // pred_region
      _
    $region57: #{tpu_custom_call.1} parent=1 // pred_fallthru
      _
    // Predicated region
    $region58: #{tpu_custom_call.1} parent=1 // pred_check
      _
    $region59: #{tpu_custom_call.1} parent=1 // pred_check_branch
      %51 = sbr.rel (0) target = $region61
    $region60: #{tpu_custom_call.1} parent=1 // pred_region
      _
    $region61: #{tpu_custom_call.1} parent=1 // pred_fallthru
      _
    // Predicated region
    $region62: #{tpu_custom_call.1} parent=1 // pred_check
      _
    $region63: #{tpu_custom_call.1} parent=1 // pred_check_branch
      %53 = sbr.rel (0) target = $region65
    $region64: #{tpu_custom_call.1} parent=1 // pred_region
      _
    $region65: #{tpu_custom_call.1} parent=1 // pred_fallthru
      _
    %v55 = vld [vmem:[%s0] sm:$0xff]
    %v56 = vld [vmem:[%s0 + $0x8] sm:$0xff]
    %v57 = vld [vmem:[%s0 + $0x10] sm:$0xff]
    %v58 = vld [vmem:[%s0 + $0x18] sm:$0xff]
    %v59 = vld [vmem:[%s0 + $0x20] sm:$0xff]
    %v60 = vld [vmem:[%s0 + $0x28] sm:$0xff]
    %v61 = vld [vmem:[%s0 + $0x30] sm:$0xff]
    %v62 = vld [vmem:[%s0 + $0x38] sm:$0xff]
    %v63 = vpack.c.bf16 %v56, %v55
    %v64 = vpack.c.bf16 %v58, %v57
    %v65 = vpack.c.bf16 %v60, %v59
    %v66 = vpack.c.bf16 %v62, %v61
    %v67 = vld [vmem:[%s2] sm:$0x3]
    %v68 = vld [vmem:[%s4] sm:$0x1]
    %v70 = vlaneseq
    %v71 = vshrl.u32 %v70, 7
    %v72 = vsub.s32 0, %v71
    %v73 = vrot.slane %v68, %v72
    %vm75 = vcmask 31744
    %v77 = vsel %vm75, %v63, 0
    %v80 = vsel %vm75, %v64, 0
    %v83 = vsel %vm75, %v65, 0
    %v86 = vsel %vm75, %v66, 0
    %vm88 = vcmask 1041408
    %v90 = vsel %vm88, %v67, 0
    %92 = vmatprep.subr.bf16.mxu0 0
    %93 = vmatpush1.bf16.msra.mxu0 0
    %94 = vmatprep.subr.bf16.mxu0 0
    %95 = vmatpush1.bf16.msra.mxu0 0
    %96 = vmatprep.subr.bf16.mxu0 0
    %97 = vmatpush1.bf16.msra.mxu0 0
    %98 = vmatprep.subr.bf16.mxu0 0
    %99 = vmatpush1.bf16.msra.mxu0 0
    %100 = vmatprep.subr.bf16.mxu0 0
    %101 = vmatpush1.bf16.msra.mxu0 0
    %102 = vmatprep.subr.bf16.mxu0 0
    %103 = vmatpush1.bf16.msra.mxu0 0
    %104 = vmatprep.subr.bf16.mxu0 0
    %105 = vmatpush1.bf16.msra.mxu0 0
    %106 = vmatprep.subr.bf16.mxu0 0
    %107 = vmatpush1.bf16.msra.mxu0 %v90
    %108 = vmatprep.subr.bf16.mxu0 0
    %109 = vmatpush2.bf16.msra.mxu0 0
    %110 = vmatprep.subr.bf16.mxu0 0
    %111 = vmatpush2.bf16.msra.mxu0 0
    %112 = vmatprep.subr.bf16.mxu0 0
    %113 = vmatpush2.bf16.msra.mxu0 0
    %114 = vmatprep.subr.bf16.mxu0 0
    %115 = vmatpush2.bf16.msra.mxu0 0
    %116 = vmatprep.subr.bf16.mxu0 0
    %117 = vmatpush2.bf16.msra.mxu0 0
    %118 = vmatprep.subr.bf16.mxu0 0
    %119 = vmatpush2.bf16.msra.mxu0 0
    %120 = vmatprep.subr.bf16.mxu0 0
    %121 = vmatpush2.bf16.msra.mxu0 0
    %122 = vmatprep.subr.bf16.mxu0 0
    %123 = vmatpush2.bf16.msra.mxu0 0
    %124 = vmatprep.mubr.bf16.mxu0 0
    %125 = vmatmul.mubr.bf16.gmra.mxu0 %v77
    %v126 = vpop.f32.mrf.mxu0
    %v127 = vadd.f32 %v73, %v126
    %v128 = vpop.f32.mrf.mxu0
    %v129 = vpop.f32.mrf.mxu0
    %v130 = vadd.f32 %v73, %v129
    %v131 = vpop.f32.mrf.mxu0
    %132 = vmatprep.mubr.bf16.mxu0 0
    %133 = vmatmul.mubr.bf16.gmra.mxu0 %v80
    %v134 = vpop.f32.mrf.mxu0
    %v135 = vadd.f32 %v73, %v134
    %v136 = vpop.f32.mrf.mxu0
    %v137 = vpop.f32.mrf.mxu0
    %v138 = vadd.f32 %v73, %v137
    %v139 = vpop.f32.mrf.mxu0
    %140 = vmatprep.mubr.bf16.mxu0 0
    %141 = vmatmul.mubr.bf16.gmra.mxu0 %v83
    %v142 = vpop.f32.mrf.mxu0
    %v143 = vadd.f32 %v73, %v142
    %v144 = vpop.f32.mrf.mxu0
    %v145 = vpop.f32.mrf.mxu0
    %v146 = vadd.f32 %v73, %v145
    %v147 = vpop.f32.mrf.mxu0
    %148 = vmatprep.mubr.bf16.mxu0 0
    %149 = vmatmul.mubr.bf16.gmra.mxu0 %v86
    %v150 = vpop.f32.mrf.mxu0
    %v151 = vadd.f32 %v73, %v150
    %v152 = vpop.f32.mrf.mxu0
    %v153 = vpop.f32.mrf.mxu0
    %v154 = vadd.f32 %v73, %v153
    %v155 = vpop.f32.mrf.mxu0
    %156 = vdwg.mxu0
    %157 = vst [vmem:[#allocation2] sm:$0xff] %v127
    %158 = vst [vmem:[#allocation2 + $0x8] sm:$0xff] %v130
    %159 = vst [vmem:[#allocation2 + $0x10] sm:$0xff] %v135
    %160 = vst [vmem:[#allocation2 + $0x18] sm:$0xff] %v138
    %161 = vst [vmem:[#allocation2 + $0x20] sm:$0xff] %v143
    %162 = vst [vmem:[#allocation2 + $0x28] sm:$0xff] %v146
    %163 = vst [vmem:[#allocation2 + $0x30] sm:$0xff] %v151
    %164 = vst [vmem:[#allocation2 + $0x38] sm:$0xff] %v154
    loop: start=0, step=1, limit=8
    $region66: #{tpu_custom_call.1} parent=1 // loop_pre_header
      _
    $region67: #{tpu_custom_call.1} parent=1 // loop_header
      %s166 = sphi 0, %s170
      %p167 = scmp.ge.s32.totalorder %s166, 8
      %v171 = vphi 0.0, %v264
      %v172 = vphi 0.0, %v258
    $region68: #{tpu_custom_call.1} parent=1 // loop_header_branch
      %169 = sbr.rel (%p167) target = $region72
    $region69: #{tpu_custom_call.1} parent=1 // loop_body
      %s173 = smul.u32 %s166, 8
      %s174 = scalar_lea.vmem [#allocation2], %s173
      %v175 = vld [vmem:[%s174] sm:$0xff]
      %v176 = vpack.c.bf16 %v171, %v171
      %v177 = vld [vmem:[%s3] sm:$0xf]
      %v178 = vld [vmem:[%s3 + $0x4] sm:$0xf]
      %v179 = vld [vmem:[%s3 + $0x8] sm:$0xf]
      %v180 = vld [vmem:[%s3 + $0xc] sm:$0xf]
      %182 = vrot.lane.b32.xlu0 %v176, 32
      %v183 = vpop.permute.xlu0 %182
      %v188 = vunpack.c.l.b16 %v177
      %v189 = vunpack.c.l.b16 %v178
      %v190 = vunpack.c.l.b16 %v179
      %v191 = vunpack.c.l.b16 %v180
      %v192 = vpack.c.b16 %v189, %v188
      %v193 = vpack.c.b16 %v191, %v190
      %vm196 = vcmask 261120
      %v198 = vsel %vm196, %v183, 0
      %200 = vmatprep.subr.bf16.mxu0 0
      %201 = vmatpush1.bf16.msra.mxu0 0
      %202 = vmatprep.subr.bf16.mxu0 0
      %203 = vmatpush1.bf16.msra.mxu0 0
      %204 = vmatprep.subr.bf16.mxu0 0
      %205 = vmatpush1.bf16.msra.mxu0 0
      %206 = vmatprep.subr.bf16.mxu0 0
      %207 = vmatpush1.bf16.msra.mxu0 0
      %208 = vmatprep.subr.bf16.mxu0 0
      %209 = vmatpush1.bf16.msra.mxu0 0
      %210 = vmatprep.subr.bf16.mxu0 0
      %211 = vmatpush1.bf16.msra.mxu0 0
      %212 = vmatprep.subr.bf16.mxu0 0
      %213 = vmatpush1.bf16.msra.mxu0 %v193
      %214 = vmatprep.subr.bf16.mxu0 0
      %215 = vmatpush1.bf16.msra.mxu0 %v192
      %216 = vmatprep.subr.bf16.mxu0 0
      %217 = vmatpush2.bf16.msra.mxu0 0
      %218 = vmatprep.subr.bf16.mxu0 0
      %219 = vmatpush2.bf16.msra.mxu0 0
      %220 = vmatprep.subr.bf16.mxu0 0
      %221 = vmatpush2.bf16.msra.mxu0 0
      %222 = vmatprep.subr.bf16.mxu0 0
      %223 = vmatpush2.bf16.msra.mxu0 0
      %224 = vmatprep.subr.bf16.mxu0 0
      %225 = vmatpush2.bf16.msra.mxu0 0
      %226 = vmatprep.subr.bf16.mxu0 0
      %227 = vmatpush2.bf16.msra.mxu0 0
      %228 = vmatprep.subr.bf16.mxu0 0
      %229 = vmatpush2.bf16.msra.mxu0 0
      %230 = vmatprep.subr.bf16.mxu0 0
      %231 = vmatpush2.bf16.msra.mxu0 0
      %232 = vmatprep.mubr.bf16.mxu0 0
      %233 = vmatmul.mubr.bf16.gmra.mxu0 %v198
      %v234 = vpop.f32.mrf.mxu0
      %v235 = vadd.f32 0.0, %v234
      %v236 = vpop.f32.mrf.mxu0
      %v237 = vpop.f32.mrf.mxu0
      %v238 = vpop.f32.mrf.mxu0
      %239 = vdwg.mxu0
      %v240 = vadd.f32 %v175, %v235
      %v241 = vxor.u32 %v240, 2147483648
      %v242 = vmul.f32 %v241, 1.442695
      %v243 = vpow.pop %v242
      %v244 = vadd.f32 %v243, 1.0
      %v245 = vrcp.pop %v244
      %v246 = vmul.f32 1.0, %v245
      %v247 = vtanh.pop %v240
      %v248 = vmul.f32 %v246, %v172
      %250 = vrot.lane.b32.xlu0 %v247, 64
      %v251 = vpop.permute.xlu0 %250
      %v253 = vmul.f32 %v246, %v251
      %255 = vrot.lane.b32.xlu0 %v253, 32
      %v256 = vpop.permute.xlu0 %255
      %v258 = vadd.f32 %v248, %v256
      %v259 = vtanh.pop %v258
      %261 = vrot.lane.b32.xlu0 %v259, 64
      %v262 = vpop.permute.xlu0 %261
      %v264 = vmul.f32 %v246, %v262
      %266 = vrot.lane.b32.xlu0 %v264, 32
      %v267 = vpop.permute.xlu0 %266
      %s269 = scalar_lea.vmem [#allocation3], %s173
      %270 = vst.msk [vmem:[%s269] sm:$0xff] %vm196, %v267
    $region70: #{tpu_custom_call.1} parent=1 // loop_footer
      %s170 = sadd.s32 1, %s166
    $region71: #{tpu_custom_call.1} parent=1 // loop_footer_branch
      %165 = sbr.rel target = $region67
    $region72: #{tpu_custom_call.1} parent=1 // loop_exit
      _
    %v271 = vld [vmem:[#allocation3] sm:$0xff]
    %v272 = vld [vmem:[#allocation3 + $0x8] sm:$0xff]
    %v273 = vld [vmem:[#allocation3 + $0x10] sm:$0xff]
    %v274 = vld [vmem:[#allocation3 + $0x18] sm:$0xff]
    %v275 = vld [vmem:[#allocation3 + $0x20] sm:$0xff]
    %v276 = vld [vmem:[#allocation3 + $0x28] sm:$0xff]
    %v277 = vld [vmem:[#allocation3 + $0x30] sm:$0xff]
    %v278 = vld [vmem:[#allocation3 + $0x38] sm:$0xff]
    %v279 = vpack.c.bf16 %v272, %v271
    %v280 = vpack.c.bf16 %v274, %v273
    %v281 = vpack.c.bf16 %v276, %v275
    %v282 = vpack.c.bf16 %v278, %v277
    %v283 = vld [vmem:[%s5] sm:$0xf]
    %v284 = vld [vmem:[%s5 + $0x4] sm:$0xf]
    %v285 = vld [vmem:[%s5 + $0x8] sm:$0xf]
    %v286 = vld [vmem:[%s5 + $0xc] sm:$0xf]
    %v287 = vld [vmem:[%s7] sm:$0x1]
    %v289 = vlaneseq
    %v290 = vshrl.u32 %v289, 7
    %v291 = vsub.s32 0, %v290
    %v292 = vrot.slane %v287, %v291
    %v298 = vunpack.c.l.b16 %v283
    %v299 = vunpack.c.l.b16 %v284
    %v300 = vunpack.c.l.b16 %v285
    %v301 = vunpack.c.l.b16 %v286
    %v302 = vpack.c.b16 %v299, %v298
    %v303 = vpack.c.b16 %v301, %v300
    %vm306 = vcmask 261120
    %v308 = vsel %vm306, %v279, 0
    %v311 = vsel %vm306, %v280, 0
    %v314 = vsel %vm306, %v281, 0
    %v317 = vsel %vm306, %v282, 0
    %319 = vmatprep.subr.bf16.mxu0 0
    %320 = vmatpush1.bf16.msra.mxu0 0
    %321 = vmatprep.subr.bf16.mxu0 0
    %322 = vmatpush1.bf16.msra.mxu0 0
    %323 = vmatprep.subr.bf16.mxu0 0
    %324 = vmatpush1.bf16.msra.mxu0 0
    %325 = vmatprep.subr.bf16.mxu0 0
    %326 = vmatpush1.bf16.msra.mxu0 0
    %327 = vmatprep.subr.bf16.mxu0 0
    %328 = vmatpush1.bf16.msra.mxu0 0
    %329 = vmatprep.subr.bf16.mxu0 0
    %330 = vmatpush1.bf16.msra.mxu0 0
    %331 = vmatprep.subr.bf16.mxu0 0
    %332 = vmatpush1.bf16.msra.mxu0 %v303
    %333 = vmatprep.subr.bf16.mxu0 0
    %334 = vmatpush1.bf16.msra.mxu0 %v302
    %335 = vmatprep.subr.bf16.mxu0 0
    %336 = vmatpush2.bf16.msra.mxu0 0
    %337 = vmatprep.subr.bf16.mxu0 0
    %338 = vmatpush2.bf16.msra.mxu0 0
    %339 = vmatprep.subr.bf16.mxu0 0
    %340 = vmatpush2.bf16.msra.mxu0 0
    %341 = vmatprep.subr.bf16.mxu0 0
    %342 = vmatpush2.bf16.msra.mxu0 0
    %343 = vmatprep.subr.bf16.mxu0 0
    %344 = vmatpush2.bf16.msra.mxu0 0
    %345 = vmatprep.subr.bf16.mxu0 0
    %346 = vmatpush2.bf16.msra.mxu0 0
    %347 = vmatprep.subr.bf16.mxu0 0
    %348 = vmatpush2.bf16.msra.mxu0 0
    %349 = vmatprep.subr.bf16.mxu0 0
    %350 = vmatpush2.bf16.msra.mxu0 0
    %351 = vmatprep.mubr.bf16.mxu0 0
    %352 = vmatmul.mubr.bf16.gmra.mxu0 %v308
    %v353 = vpop.f32.mrf.mxu0
    %v354 = vadd.f32 %v292, %v353
    %v355 = vpop.f32.mrf.mxu0
    %v356 = vpop.f32.mrf.mxu0
    %v357 = vadd.f32 %v292, %v356
    %v358 = vpop.f32.mrf.mxu0
    %359 = vmatprep.mubr.bf16.mxu0 0
    %360 = vmatmul.mubr.bf16.gmra.mxu0 %v311
    %v361 = vpop.f32.mrf.mxu0
    %v362 = vadd.f32 %v292, %v361
    %v363 = vpop.f32.mrf.mxu0
    %v364 = vpop.f32.mrf.mxu0
    %v365 = vadd.f32 %v292, %v364
    %v366 = vpop.f32.mrf.mxu0
    %367 = vmatprep.mubr.bf16.mxu0 0
    %368 = vmatmul.mubr.bf16.gmra.mxu0 %v314
    %v369 = vpop.f32.mrf.mxu0
    %v370 = vadd.f32 %v292, %v369
    %v371 = vpop.f32.mrf.mxu0
    %v372 = vpop.f32.mrf.mxu0
    %v373 = vadd.f32 %v292, %v372
    %v374 = vpop.f32.mrf.mxu0
    %375 = vmatprep.mubr.bf16.mxu0 0
    %376 = vmatmul.mubr.bf16.gmra.mxu0 %v317
    %v377 = vpop.f32.mrf.mxu0
    %v378 = vadd.f32 %v292, %v377
    %v379 = vpop.f32.mrf.mxu0
    %v380 = vpop.f32.mrf.mxu0
    %v381 = vadd.f32 %v292, %v380
    %v382 = vpop.f32.mrf.mxu0
    %383 = vdwg.mxu0
    %384 = vst [vmem:[#allocation2] sm:$0xff] %v354
    %385 = vst [vmem:[#allocation2 + $0x8] sm:$0xff] %v357
    %386 = vst [vmem:[#allocation2 + $0x10] sm:$0xff] %v362
    %387 = vst [vmem:[#allocation2 + $0x18] sm:$0xff] %v365
    %388 = vst [vmem:[#allocation2 + $0x20] sm:$0xff] %v370
    %389 = vst [vmem:[#allocation2 + $0x28] sm:$0xff] %v373
    %390 = vst [vmem:[#allocation2 + $0x30] sm:$0xff] %v378
    %391 = vst [vmem:[#allocation2 + $0x38] sm:$0xff] %v381
    loop: start=0, step=1, limit=8
    $region73: #{tpu_custom_call.1} parent=1 // loop_pre_header
      _
    $region74: #{tpu_custom_call.1} parent=1 // loop_header
      %s393 = sphi 0, %s397
      %p394 = scmp.ge.s32.totalorder %s393, 8
      %v398 = vphi 0.0, %v490
      %v399 = vphi 0.0, %v484
    $region75: #{tpu_custom_call.1} parent=1 // loop_header_branch
      %396 = sbr.rel (%p394) target = $region79
    $region76: #{tpu_custom_call.1} parent=1 // loop_body
      %s400 = smul.u32 %s393, 8
      %s401 = scalar_lea.vmem [#allocation2], %s400
      %v402 = vld [vmem:[%s401] sm:$0xff]
      %v403 = vpack.c.bf16 %v398, %v398
      %v404 = vld [vmem:[%s6] sm:$0xf]
      %v405 = vld [vmem:[%s6 + $0x4] sm:$0xf]
      %v406 = vld [vmem:[%s6 + $0x8] sm:$0xf]
      %v407 = vld [vmem:[%s6 + $0xc] sm:$0xf]
      %409 = vrot.lane.b32.xlu0 %v403, 32
      %v410 = vpop.permute.xlu0 %409
      %v415 = vunpack.c.l.b16 %v404
      %v416 = vunpack.c.l.b16 %v405
      %v417 = vunpack.c.l.b16 %v406
      %v418 = vunpack.c.l.b16 %v407
      %v419 = vpack.c.b16 %v416, %v415
      %v420 = vpack.c.b16 %v418, %v417
      %v424 = vsel %vm306, %v410, 0
      %426 = vmatprep.subr.bf16.mxu0 0
      %427 = vmatpush1.bf16.msra.mxu0 0
      %428 = vmatprep.subr.bf16.mxu0 0
      %429 = vmatpush1.bf16.msra.mxu0 0
      %430 = vmatprep.subr.bf16.mxu0 0
      %431 = vmatpush1.bf16.msra.mxu0 0
      %432 = vmatprep.subr.bf16.mxu0 0
      %433 = vmatpush1.bf16.msra.mxu0 0
      %434 = vmatprep.subr.bf16.mxu0 0
      %435 = vmatpush1.bf16.msra.mxu0 0
      %436 = vmatprep.subr.bf16.mxu0 0
      %437 = vmatpush1.bf16.msra.mxu0 0
      %438 = vmatprep.subr.bf16.mxu0 0
      %439 = vmatpush1.bf16.msra.mxu0 %v420
      %440 = vmatprep.subr.bf16.mxu0 0
      %441 = vmatpush1.bf16.msra.mxu0 %v419
      %442 = vmatprep.subr.bf16.mxu0 0
      %443 = vmatpush2.bf16.msra.mxu0 0
      %444 = vmatprep.subr.bf16.mxu0 0
      %445 = vmatpush2.bf16.msra.mxu0 0
      %446 = vmatprep.subr.bf16.mxu0 0
      %447 = vmatpush2.bf16.msra.mxu0 0
      %448 = vmatprep.subr.bf16.mxu0 0
      %449 = vmatpush2.bf16.msra.mxu0 0
      %450 = vmatprep.subr.bf16.mxu0 0
      %451 = vmatpush2.bf16.msra.mxu0 0
      %452 = vmatprep.subr.bf16.mxu0 0
      %453 = vmatpush2.bf16.msra.mxu0 0
      %454 = vmatprep.subr.bf16.mxu0 0
      %455 = vmatpush2.bf16.msra.mxu0 0
      %456 = vmatprep.subr.bf16.mxu0 0
      %457 = vmatpush2.bf16.msra.mxu0 0
      %458 = vmatprep.mubr.bf16.mxu0 0
      %459 = vmatmul.mubr.bf16.gmra.mxu0 %v424
      %v460 = vpop.f32.mrf.mxu0
      %v461 = vadd.f32 0.0, %v460
      %v462 = vpop.f32.mrf.mxu0
      %v463 = vpop.f32.mrf.mxu0
      %v464 = vpop.f32.mrf.mxu0
      %465 = vdwg.mxu0
      %v466 = vadd.f32 %v402, %v461
      %v467 = vxor.u32 %v466, 2147483648
      %v468 = vmul.f32 %v467, 1.442695
      %v469 = vpow.pop %v468
      %v470 = vadd.f32 %v469, 1.0
      %v471 = vrcp.pop %v470
      %v472 = vmul.f32 1.0, %v471
      %v473 = vtanh.pop %v466
      %v474 = vmul.f32 %v472, %v399
      %476 = vrot.lane.b32.xlu0 %v473, 64
      %v477 = vpop.permute.xlu0 %476
      %v479 = vmul.f32 %v472, %v477
      %481 = vrot.lane.b32.xlu0 %v479, 32
      %v482 = vpop.permute.xlu0 %481
      %v484 = vadd.f32 %v474, %v482
      %v485 = vtanh.pop %v484
      %487 = vrot.lane.b32.xlu0 %v485, 64
      %v488 = vpop.permute.xlu0 %487
      %v490 = vmul.f32 %v472, %v488
      %492 = vrot.lane.b32.xlu0 %v490, 32
      %v493 = vpop.permute.xlu0 %492
      %s495 = scalar_lea.vmem [#allocation3], %s400
      %496 = vst.msk [vmem:[%s495] sm:$0xff] %vm306, %v493
    $region77: #{tpu_custom_call.1} parent=1 // loop_footer
      %s397 = sadd.s32 1, %s393
    $region78: #{tpu_custom_call.1} parent=1 // loop_footer_branch
      %392 = sbr.rel target = $region74
    $region79: #{tpu_custom_call.1} parent=1 // loop_exit
      _
    %v497 = vld [vmem:[%s1] sm:$0xff]
    %v498 = vld [vmem:[%s1 + $0x8] sm:$0xff]
    %v499 = vld [vmem:[%s1 + $0x10] sm:$0xff]
    %v500 = vld [vmem:[%s1 + $0x18] sm:$0xff]
    %v501 = vld [vmem:[%s1 + $0x20] sm:$0xff]
    %v502 = vld [vmem:[%s1 + $0x28] sm:$0xff]
    %v503 = vld [vmem:[%s1 + $0x30] sm:$0xff]
    %v504 = vld [vmem:[%s1 + $0x38] sm:$0xff]
    %v505 = vpack.c.bf16 %v498, %v497
    %v506 = vpack.c.bf16 %v500, %v499
    %v507 = vpack.c.bf16 %v502, %v501
    %v508 = vpack.c.bf16 %v504, %v503
    %v509 = vld [vmem:[%s8] sm:$0x7]
    %v510 = vld [vmem:[%s10] sm:$0x1]
    %v512 = vlaneseq
    %v513 = vshrl.u32 %v512, 7
    %v514 = vsub.s32 0, %v513
    %v515 = vrot.slane %v510, %v514
    %vm517 = vcmask 48128
    %v519 = vsel %vm517, %v505, 0
    %v522 = vsel %vm517, %v506, 0
    %v525 = vsel %vm517, %v507, 0
    %v528 = vsel %vm517, %v508, 0
    %vm530 = vcmask 1042432
    %v532 = vsel %vm530, %v509, 0
    %534 = vmatprep.subr.bf16.mxu0 0
    %535 = vmatpush1.bf16.msra.mxu0 0
    %536 = vmatprep.subr.bf16.mxu0 0
    %537 = vmatpush1.bf16.msra.mxu0 0
    %538 = vmatprep.subr.bf16.mxu0 0
    %539 = vmatpush1.bf16.msra.mxu0 0
    %540 = vmatprep.subr.bf16.mxu0 0
    %541 = vmatpush1.bf16.msra.mxu0 0
    %542 = vmatprep.subr.bf16.mxu0 0
    %543 = vmatpush1.bf16.msra.mxu0 0
    %544 = vmatprep.subr.bf16.mxu0 0
    %545 = vmatpush1.bf16.msra.mxu0 0
    %546 = vmatprep.subr.bf16.mxu0 0
    %547 = vmatpush1.bf16.msra.mxu0 0
    %548 = vmatprep.subr.bf16.mxu0 0
    %549 = vmatpush1.bf16.msra.mxu0 %v532
    %550 = vmatprep.subr.bf16.mxu0 0
    %551 = vmatpush2.bf16.msra.mxu0 0
    %552 = vmatprep.subr.bf16.mxu0 0
    %553 = vmatpush2.bf16.msra.mxu0 0
    %554 = vmatprep.subr.bf16.mxu0 0
    %555 = vmatpush2.bf16.msra.mxu0 0
    %556 = vmatprep.subr.bf16.mxu0 0
    %557 = vmatpush2.bf16.msra.mxu0 0
    %558 = vmatprep.subr.bf16.mxu0 0
    %559 = vmatpush2.bf16.msra.mxu0 0
    %560 = vmatprep.subr.bf16.mxu0 0
    %561 = vmatpush2.bf16.msra.mxu0 0
    %562 = vmatprep.subr.bf16.mxu0 0
    %563 = vmatpush2.bf16.msra.mxu0 0
    %564 = vmatprep.subr.bf16.mxu0 0
    %565 = vmatpush2.bf16.msra.mxu0 0
    %566 = vmatprep.mubr.bf16.mxu0 0
    %567 = vmatmul.mubr.bf16.gmra.mxu0 %v519
    %v568 = vpop.f32.mrf.mxu0
    %v569 = vadd.f32 %v515, %v568
    %v570 = vpop.f32.mrf.mxu0
    %v571 = vpop.f32.mrf.mxu0
    %v572 = vadd.f32 %v515, %v571
    %v573 = vpop.f32.mrf.mxu0
    %574 = vmatprep.mubr.bf16.mxu0 0
    %575 = vmatmul.mubr.bf16.gmra.mxu0 %v522
    %v576 = vpop.f32.mrf.mxu0
    %v577 = vadd.f32 %v515, %v576
    %v578 = vpop.f32.mrf.mxu0
    %v579 = vpop.f32.mrf.mxu0
    %v580 = vadd.f32 %v515, %v579
    %v581 = vpop.f32.mrf.mxu0
    %582 = vmatprep.mubr.bf16.mxu0 0
    %583 = vmatmul.mubr.bf16.gmra.mxu0 %v525
    %v584 = vpop.f32.mrf.mxu0
    %v585 = vadd.f32 %v515, %v584
    %v586 = vpop.f32.mrf.mxu0
    %v587 = vpop.f32.mrf.mxu0
    %v588 = vadd.f32 %v515, %v587
    %v589 = vpop.f32.mrf.mxu0
    %590 = vmatprep.mubr.bf16.mxu0 0
    %591 = vmatmul.mubr.bf16.gmra.mxu0 %v528
    %v592 = vpop.f32.mrf.mxu0
    %v593 = vadd.f32 %v515, %v592
    %v594 = vpop.f32.mrf.mxu0
    %v595 = vpop.f32.mrf.mxu0
    %v596 = vadd.f32 %v515, %v595
    %v597 = vpop.f32.mrf.mxu0
    %598 = vdwg.mxu0
    %599 = vst [vmem:[#allocation2] sm:$0xff] %v569
    %600 = vst [vmem:[#allocation2 + $0x8] sm:$0xff] %v572
    %601 = vst [vmem:[#allocation2 + $0x10] sm:$0xff] %v577
    %602 = vst [vmem:[#allocation2 + $0x18] sm:$0xff] %v580
    %603 = vst [vmem:[#allocation2 + $0x20] sm:$0xff] %v585
    %604 = vst [vmem:[#allocation2 + $0x28] sm:$0xff] %v588
    %605 = vst [vmem:[#allocation2 + $0x30] sm:$0xff] %v593
    %606 = vst [vmem:[#allocation2 + $0x38] sm:$0xff] %v596
    loop: start=0, step=1, limit=8
    $region80: #{tpu_custom_call.1} parent=1 // loop_pre_header
      _
    $region81: #{tpu_custom_call.1} parent=1 // loop_header
      %s608 = sphi 0, %s612
      %p609 = scmp.ge.s32.totalorder %s608, 8
      %v613 = vphi %v171, %v705
      %v614 = vphi %v172, %v699
    $region82: #{tpu_custom_call.1} parent=1 // loop_header_branch
      %611 = sbr.rel (%p609) target = $region86
    $region83: #{tpu_custom_call.1} parent=1 // loop_body
      %s615 = smul.u32 %s608, 8
      %s616 = scalar_lea.vmem [#allocation2], %s615
      %v617 = vld [vmem:[%s616] sm:$0xff]
      %v618 = vpack.c.bf16 %v613, %v613
      %v619 = vld [vmem:[%s9] sm:$0xf]
      %v620 = vld [vmem:[%s9 + $0x4] sm:$0xf]
      %v621 = vld [vmem:[%s9 + $0x8] sm:$0xf]
      %v622 = vld [vmem:[%s9 + $0xc] sm:$0xf]
      %624 = vrot.lane.b32.xlu0 %v618, 32
      %v625 = vpop.permute.xlu0 %624
      %v630 = vunpack.c.l.b16 %v619
      %v631 = vunpack.c.l.b16 %v620
      %v632 = vunpack.c.l.b16 %v621
      %v633 = vunpack.c.l.b16 %v622
      %v634 = vpack.c.b16 %v631, %v630
      %v635 = vpack.c.b16 %v633, %v632
      %v639 = vsel %vm306, %v625, 0
      %641 = vmatprep.subr.bf16.mxu0 0
      %642 = vmatpush1.bf16.msra.mxu0 0
      %643 = vmatprep.subr.bf16.mxu0 0
      %644 = vmatpush1.bf16.msra.mxu0 0
      %645 = vmatprep.subr.bf16.mxu0 0
      %646 = vmatpush1.bf16.msra.mxu0 0
      %647 = vmatprep.subr.bf16.mxu0 0
      %648 = vmatpush1.bf16.msra.mxu0 0
      %649 = vmatprep.subr.bf16.mxu0 0
      %650 = vmatpush1.bf16.msra.mxu0 0
      %651 = vmatprep.subr.bf16.mxu0 0
      %652 = vmatpush1.bf16.msra.mxu0 0
      %653 = vmatprep.subr.bf16.mxu0 0
      %654 = vmatpush1.bf16.msra.mxu0 %v635
      %655 = vmatprep.subr.bf16.mxu0 0
      %656 = vmatpush1.bf16.msra.mxu0 %v634
      %657 = vmatprep.subr.bf16.mxu0 0
      %658 = vmatpush2.bf16.msra.mxu0 0
      %659 = vmatprep.subr.bf16.mxu0 0
      %660 = vmatpush2.bf16.msra.mxu0 0
      %661 = vmatprep.subr.bf16.mxu0 0
      %662 = vmatpush2.bf16.msra.mxu0 0
      %663 = vmatprep.subr.bf16.mxu0 0
      %664 = vmatpush2.bf16.msra.mxu0 0
      %665 = vmatprep.subr.bf16.mxu0 0
      %666 = vmatpush2.bf16.msra.mxu0 0
      %667 = vmatprep.subr.bf16.mxu0 0
      %668 = vmatpush2.bf16.msra.mxu0 0
      %669 = vmatprep.subr.bf16.mxu0 0
      %670 = vmatpush2.bf16.msra.mxu0 0
      %671 = vmatprep.subr.bf16.mxu0 0
      %672 = vmatpush2.bf16.msra.mxu0 0
      %673 = vmatprep.mubr.bf16.mxu0 0
      %674 = vmatmul.mubr.bf16.gmra.mxu0 %v639
      %v675 = vpop.f32.mrf.mxu0
      %v676 = vadd.f32 0.0, %v675
      %v677 = vpop.f32.mrf.mxu0
      %v678 = vpop.f32.mrf.mxu0
      %v679 = vpop.f32.mrf.mxu0
      %680 = vdwg.mxu0
      %v681 = vadd.f32 %v617, %v676
      %v682 = vxor.u32 %v681, 2147483648
      %v683 = vmul.f32 %v682, 1.442695
      %v684 = vpow.pop %v683
      %v685 = vadd.f32 %v684, 1.0
      %v686 = vrcp.pop %v685
      %v687 = vmul.f32 1.0, %v686
      %v688 = vtanh.pop %v681
      %v689 = vmul.f32 %v687, %v614
      %691 = vrot.lane.b32.xlu0 %v688, 64
      %v692 = vpop.permute.xlu0 %691
      %v694 = vmul.f32 %v687, %v692
      %696 = vrot.lane.b32.xlu0 %v694, 32
      %v697 = vpop.permute.xlu0 %696
      %v699 = vadd.f32 %v689, %v697
      %v700 = vtanh.pop %v699
      %702 = vrot.lane.b32.xlu0 %v700, 64
      %v703 = vpop.permute.xlu0 %702
      %v705 = vmul.f32 %v687, %v703
      %707 = vrot.lane.b32.xlu0 %v705, 32
      %v708 = vpop.permute.xlu0 %707
      %s710 = scalar_lea.vmem [#allocation3], %s615
      %711 = vst.msk [vmem:[%s710] sm:$0xff] %vm306, %v708
    $region84: #{tpu_custom_call.1} parent=1 // loop_footer
      %s612 = sadd.s32 1, %s608
    $region85: #{tpu_custom_call.1} parent=1 // loop_footer_branch
      %607 = sbr.rel target = $region81
    $region86: #{tpu_custom_call.1} parent=1 // loop_exit
      _
    %v712 = vld [vmem:[#allocation3] sm:$0xff]
    %v713 = vld [vmem:[#allocation3 + $0x8] sm:$0xff]
    %v714 = vld [vmem:[#allocation3 + $0x10] sm:$0xff]
    %v715 = vld [vmem:[#allocation3 + $0x18] sm:$0xff]
    %v716 = vld [vmem:[#allocation3 + $0x20] sm:$0xff]
    %v717 = vld [vmem:[#allocation3 + $0x28] sm:$0xff]
    %v718 = vld [vmem:[#allocation3 + $0x30] sm:$0xff]
    %v719 = vld [vmem:[#allocation3 + $0x38] sm:$0xff]
    %v720 = vpack.c.bf16 %v713, %v712
    %v721 = vpack.c.bf16 %v715, %v714
    %v722 = vpack.c.bf16 %v717, %v716
    %v723 = vpack.c.bf16 %v719, %v718
    %v724 = vld [vmem:[%s11] sm:$0xf]
    %v725 = vld [vmem:[%s11 + $0x4] sm:$0xf]
    %v726 = vld [vmem:[%s11 + $0x8] sm:$0xf]
    %v727 = vld [vmem:[%s11 + $0xc] sm:$0xf]
    %v728 = vld [vmem:[%s13] sm:$0x1]
    %v730 = vlaneseq
    %v731 = vshrl.u32 %v730, 7
    %v732 = vsub.s32 0, %v731
    %v733 = vrot.slane %v728, %v732
    %v739 = vunpack.c.l.b16 %v724
    %v740 = vunpack.c.l.b16 %v725
    %v741 = vunpack.c.l.b16 %v726
    %v742 = vunpack.c.l.b16 %v727
    %v743 = vpack.c.b16 %v740, %v739
    %v744 = vpack.c.b16 %v742, %v741
    %v748 = vsel %vm306, %v720, 0
    %v751 = vsel %vm306, %v721, 0
    %v754 = vsel %vm306, %v722, 0
    %v757 = vsel %vm306, %v723, 0
    %759 = vmatprep.subr.bf16.mxu0 0
    %760 = vmatpush1.bf16.msra.mxu0 0
    %761 = vmatprep.subr.bf16.mxu0 0
    %762 = vmatpush1.bf16.msra.mxu0 0
    %763 = vmatprep.subr.bf16.mxu0 0
    %764 = vmatpush1.bf16.msra.mxu0 0
    %765 = vmatprep.subr.bf16.mxu0 0
    %766 = vmatpush1.bf16.msra.mxu0 0
    %767 = vmatprep.subr.bf16.mxu0 0
    %768 = vmatpush1.bf16.msra.mxu0 0
    %769 = vmatprep.subr.bf16.mxu0 0
    %770 = vmatpush1.bf16.msra.mxu0 0
    %771 = vmatprep.subr.bf16.mxu0 0
    %772 = vmatpush1.bf16.msra.mxu0 %v744
    %773 = vmatprep.subr.bf16.mxu0 0
    %774 = vmatpush1.bf16.msra.mxu0 %v743
    %775 = vmatprep.subr.bf16.mxu0 0
    %776 = vmatpush2.bf16.msra.mxu0 0
    %777 = vmatprep.subr.bf16.mxu0 0
    %778 = vmatpush2.bf16.msra.mxu0 0
    %779 = vmatprep.subr.bf16.mxu0 0
    %780 = vmatpush2.bf16.msra.mxu0 0
    %781 = vmatprep.subr.bf16.mxu0 0
    %782 = vmatpush2.bf16.msra.mxu0 0
    %783 = vmatprep.subr.bf16.mxu0 0
    %784 = vmatpush2.bf16.msra.mxu0 0
    %785 = vmatprep.subr.bf16.mxu0 0
    %786 = vmatpush2.bf16.msra.mxu0 0
    %787 = vmatprep.subr.bf16.mxu0 0
    %788 = vmatpush2.bf16.msra.mxu0 0
    %789 = vmatprep.subr.bf16.mxu0 0
    %790 = vmatpush2.bf16.msra.mxu0 0
    %791 = vmatprep.mubr.bf16.mxu0 0
    %792 = vmatmul.mubr.bf16.gmra.mxu0 %v748
    %v793 = vpop.f32.mrf.mxu0
    %v794 = vadd.f32 %v733, %v793
    %v795 = vpop.f32.mrf.mxu0
    %v796 = vpop.f32.mrf.mxu0
    %v797 = vadd.f32 %v733, %v796
    %v798 = vpop.f32.mrf.mxu0
    %799 = vmatprep.mubr.bf16.mxu0 0
    %800 = vmatmul.mubr.bf16.gmra.mxu0 %v751
    %v801 = vpop.f32.mrf.mxu0
    %v802 = vadd.f32 %v733, %v801
    %v803 = vpop.f32.mrf.mxu0
    %v804 = vpop.f32.mrf.mxu0
    %v805 = vadd.f32 %v733, %v804
    %v806 = vpop.f32.mrf.mxu0
    %807 = vmatprep.mubr.bf16.mxu0 0
    %808 = vmatmul.mubr.bf16.gmra.mxu0 %v754
    %v809 = vpop.f32.mrf.mxu0
    %v810 = vadd.f32 %v733, %v809
    %v811 = vpop.f32.mrf.mxu0
    %v812 = vpop.f32.mrf.mxu0
    %v813 = vadd.f32 %v733, %v812
    %v814 = vpop.f32.mrf.mxu0
    %815 = vmatprep.mubr.bf16.mxu0 0
    %816 = vmatmul.mubr.bf16.gmra.mxu0 %v757
    %v817 = vpop.f32.mrf.mxu0
    %v818 = vadd.f32 %v733, %v817
    %v819 = vpop.f32.mrf.mxu0
    %v820 = vpop.f32.mrf.mxu0
    %v821 = vadd.f32 %v733, %v820
    %v822 = vpop.f32.mrf.mxu0
    %823 = vdwg.mxu0
    %824 = vst [vmem:[#allocation2] sm:$0xff] %v794
    %825 = vst [vmem:[#allocation2 + $0x8] sm:$0xff] %v797
    %826 = vst [vmem:[#allocation2 + $0x10] sm:$0xff] %v802
    %827 = vst [vmem:[#allocation2 + $0x18] sm:$0xff] %v805
    %828 = vst [vmem:[#allocation2 + $0x20] sm:$0xff] %v810
    %829 = vst [vmem:[#allocation2 + $0x28] sm:$0xff] %v813
    %830 = vst [vmem:[#allocation2 + $0x30] sm:$0xff] %v818
    %831 = vst [vmem:[#allocation2 + $0x38] sm:$0xff] %v821
    loop: start=0, step=1, limit=8
    $region87: #{tpu_custom_call.1} parent=1 // loop_pre_header
      _
    $region88: #{tpu_custom_call.1} parent=1 // loop_header
      %s833 = sphi 0, %s837
      %p834 = scmp.ge.s32.totalorder %s833, 8
      %v838 = vphi %v398, %v930
      %v839 = vphi %v399, %v924
    $region89: #{tpu_custom_call.1} parent=1 // loop_header_branch
      %836 = sbr.rel (%p834) target = $region93
    $region90: #{tpu_custom_call.1} parent=1 // loop_body
      %s840 = smul.u32 %s833, 8
      %s841 = scalar_lea.vmem [#allocation2], %s840
      %v842 = vld [vmem:[%s841] sm:$0xff]
      %v843 = vpack.c.bf16 %v838, %v838
      %v844 = vld [vmem:[%s12] sm:$0xf]
      %v845 = vld [vmem:[%s12 + $0x4] sm:$0xf]
      %v846 = vld [vmem:[%s12 + $0x8] sm:$0xf]
      %v847 = vld [vmem:[%s12 + $0xc] sm:$0xf]
      %849 = vrot.lane.b32.xlu0 %v843, 32
      %v850 = vpop.permute.xlu0 %849
      %v855 = vunpack.c.l.b16 %v844
      %v856 = vunpack.c.l.b16 %v845
      %v857 = vunpack.c.l.b16 %v846
      %v858 = vunpack.c.l.b16 %v847
      %v859 = vpack.c.b16 %v856, %v855
      %v860 = vpack.c.b16 %v858, %v857
      %v864 = vsel %vm306, %v850, 0
      %866 = vmatprep.subr.bf16.mxu0 0
      %867 = vmatpush1.bf16.msra.mxu0 0
      %868 = vmatprep.subr.bf16.mxu0 0
      %869 = vmatpush1.bf16.msra.mxu0 0
      %870 = vmatprep.subr.bf16.mxu0 0
      %871 = vmatpush1.bf16.msra.mxu0 0
      %872 = vmatprep.subr.bf16.mxu0 0
      %873 = vmatpush1.bf16.msra.mxu0 0
      %874 = vmatprep.subr.bf16.mxu0 0
      %875 = vmatpush1.bf16.msra.mxu0 0
      %876 = vmatprep.subr.bf16.mxu0 0
      %877 = vmatpush1.bf16.msra.mxu0 0
      %878 = vmatprep.subr.bf16.mxu0 0
      %879 = vmatpush1.bf16.msra.mxu0 %v860
      %880 = vmatprep.subr.bf16.mxu0 0
      %881 = vmatpush1.bf16.msra.mxu0 %v859
      %882 = vmatprep.subr.bf16.mxu0 0
      %883 = vmatpush2.bf16.msra.mxu0 0
      %884 = vmatprep.subr.bf16.mxu0 0
      %885 = vmatpush2.bf16.msra.mxu0 0
      %886 = vmatprep.subr.bf16.mxu0 0
      %887 = vmatpush2.bf16.msra.mxu0 0
      %888 = vmatprep.subr.bf16.mxu0 0
      %889 = vmatpush2.bf16.msra.mxu0 0
      %890 = vmatprep.subr.bf16.mxu0 0
      %891 = vmatpush2.bf16.msra.mxu0 0
      %892 = vmatprep.subr.bf16.mxu0 0
      %893 = vmatpush2.bf16.msra.mxu0 0
      %894 = vmatprep.subr.bf16.mxu0 0
      %895 = vmatpush2.bf16.msra.mxu0 0
      %896 = vmatprep.subr.bf16.mxu0 0
      %897 = vmatpush2.bf16.msra.mxu0 0
      %898 = vmatprep.mubr.bf16.mxu0 0
      %899 = vmatmul.mubr.bf16.gmra.mxu0 %v864
      %v900 = vpop.f32.mrf.mxu0
      %v901 = vadd.f32 0.0, %v900
      %v902 = vpop.f32.mrf.mxu0
      %v903 = vpop.f32.mrf.mxu0
      %v904 = vpop.f32.mrf.mxu0
      %905 = vdwg.mxu0
      %v906 = vadd.f32 %v842, %v901
      %v907 = vxor.u32 %v906, 2147483648
      %v908 = vmul.f32 %v907, 1.442695
      %v909 = vpow.pop %v908
      %v910 = vadd.f32 %v909, 1.0
      %v911 = vrcp.pop %v910
      %v912 = vmul.f32 1.0, %v911
      %v913 = vtanh.pop %v906
      %v914 = vmul.f32 %v912, %v839
      %916 = vrot.lane.b32.xlu0 %v913, 64
      %v917 = vpop.permute.xlu0 %916
      %v919 = vmul.f32 %v912, %v917
      %921 = vrot.lane.b32.xlu0 %v919, 32
      %v922 = vpop.permute.xlu0 %921
      %v924 = vadd.f32 %v914, %v922
      %v925 = vtanh.pop %v924
      %927 = vrot.lane.b32.xlu0 %v925, 64
      %v928 = vpop.permute.xlu0 %927
      %v930 = vmul.f32 %v912, %v928
      %932 = vrot.lane.b32.xlu0 %v930, 32
      %v933 = vpop.permute.xlu0 %932
      %s935 = scalar_lea.vmem [#allocation3], %s840
      %936 = vst.msk [vmem:[%s935] sm:$0xff] %vm306, %v933
    $region91: #{tpu_custom_call.1} parent=1 // loop_footer
      %s837 = sadd.s32 1, %s833
    $region92: #{tpu_custom_call.1} parent=1 // loop_footer_branch
      %832 = sbr.rel target = $region88
    $region93: #{tpu_custom_call.1} parent=1 // loop_exit
      _
    %v937 = vld [vmem:[#allocation3] sm:$0xff]
    %v938 = vld [vmem:[#allocation3 + $0x8] sm:$0xff]
    %v939 = vld [vmem:[#allocation3 + $0x10] sm:$0xff]
    %v940 = vld [vmem:[#allocation3 + $0x18] sm:$0xff]
    %v941 = vld [vmem:[#allocation3 + $0x20] sm:$0xff]
    %v942 = vld [vmem:[#allocation3 + $0x28] sm:$0xff]
    %v943 = vld [vmem:[#allocation3 + $0x30] sm:$0xff]
    %v944 = vld [vmem:[#allocation3 + $0x38] sm:$0xff]
    %v945 = vpack.c.bf16 %v938, %v937
    %v946 = vpack.c.bf16 %v940, %v939
    %v947 = vpack.c.bf16 %v942, %v941
    %v948 = vpack.c.bf16 %v944, %v943
    %v949 = vld [vmem:[%s14] sm:$0xf]
    %v950 = vld [vmem:[%s14 + $0x4] sm:$0xf]
    %v951 = vld [vmem:[%s14 + $0x8] sm:$0xf]
    %v952 = vld [vmem:[%s14 + $0xc] sm:$0xf]
    %v953 = vld [vmem:[%s15] sm:$0x1]
    %v955 = vlaneseq
    %v956 = vshrl.u32 %v955, 7
    %v957 = vsub.s32 0, %v956
    %v958 = vrot.slane %v953, %v957
    %v964 = vunpack.c.l.b16 %v949
    %v965 = vunpack.c.l.b16 %v950
    %v966 = vunpack.c.l.b16 %v951
    %v967 = vunpack.c.l.b16 %v952
    %v968 = vpack.c.b16 %v965, %v964
    %v969 = vpack.c.b16 %v967, %v966
    %v973 = vsel %vm306, %v945, 0
    %v976 = vsel %vm306, %v946, 0
    %v979 = vsel %vm306, %v947, 0
    %v982 = vsel %vm306, %v948, 0
    %984 = vmatprep.subr.bf16.mxu0 0
    %985 = vmatpush1.bf16.msra.mxu0 0
    %986 = vmatprep.subr.bf16.mxu0 0
    %987 = vmatpush1.bf16.msra.mxu0 0
    %988 = vmatprep.subr.bf16.mxu0 0
    %989 = vmatpush1.bf16.msra.mxu0 0
    %990 = vmatprep.subr.bf16.mxu0 0
    %991 = vmatpush1.bf16.msra.mxu0 0
    %992 = vmatprep.subr.bf16.mxu0 0
    %993 = vmatpush1.bf16.msra.mxu0 0
    %994 = vmatprep.subr.bf16.mxu0 0
    %995 = vmatpush1.bf16.msra.mxu0 0
    %996 = vmatprep.subr.bf16.mxu0 0
    %997 = vmatpush1.bf16.msra.mxu0 %v969
    %998 = vmatprep.subr.bf16.mxu0 0
    %999 = vmatpush1.bf16.msra.mxu0 %v968
    %1000 = vmatprep.subr.bf16.mxu0 0
    %1001 = vmatpush2.bf16.msra.mxu0 0
    %1002 = vmatprep.subr.bf16.mxu0 0
    %1003 = vmatpush2.bf16.msra.mxu0 0
    %1004 = vmatprep.subr.bf16.mxu0 0
    %1005 = vmatpush2.bf16.msra.mxu0 0
    %1006 = vmatprep.subr.bf16.mxu0 0
    %1007 = vmatpush2.bf16.msra.mxu0 0
    %1008 = vmatprep.subr.bf16.mxu0 0
    %1009 = vmatpush2.bf16.msra.mxu0 0
    %1010 = vmatprep.subr.bf16.mxu0 0
    %1011 = vmatpush2.bf16.msra.mxu0 0
    %1012 = vmatprep.subr.bf16.mxu0 0
    %1013 = vmatpush2.bf16.msra.mxu0 0
    %1014 = vmatprep.subr.bf16.mxu0 0
    %1015 = vmatpush2.bf16.msra.mxu0 0
    %1016 = vmatprep.mubr.bf16.mxu0 0
    %1017 = vmatmul.mubr.bf16.gmra.mxu0 %v973
    %v1018 = vpop.f32.mrf.mxu0
    %v1019 = vadd.f32 %v958, %v1018
    %v1020 = vpop.f32.mrf.mxu0
    %v1021 = vpop.f32.mrf.mxu0
    %v1022 = vadd.f32 %v958, %v1021
    %v1023 = vpop.f32.mrf.mxu0
    %1024 = vmatprep.mubr.bf16.mxu0 0
    %1025 = vmatmul.mubr.bf16.gmra.mxu0 %v976
    %v1026 = vpop.f32.mrf.mxu0
    %v1027 = vadd.f32 %v958, %v1026
    %v1028 = vpop.f32.mrf.mxu0
    %v1029 = vpop.f32.mrf.mxu0
    %v1030 = vadd.f32 %v958, %v1029
    %v1031 = vpop.f32.mrf.mxu0
    %1032 = vmatprep.mubr.bf16.mxu0 0
    %1033 = vmatmul.mubr.bf16.gmra.mxu0 %v979
    %v1034 = vpop.f32.mrf.mxu0
    %v1035 = vadd.f32 %v958, %v1034
    %v1036 = vpop.f32.mrf.mxu0
    %v1037 = vpop.f32.mrf.mxu0
    %v1038 = vadd.f32 %v958, %v1037
    %v1039 = vpop.f32.mrf.mxu0
    %1040 = vmatprep.mubr.bf16.mxu0 0
    %1041 = vmatmul.mubr.bf16.gmra.mxu0 %v982
    %v1042 = vpop.f32.mrf.mxu0
    %v1043 = vadd.f32 %v958, %v1042
    %v1044 = vpop.f32.mrf.mxu0
    %v1045 = vpop.f32.mrf.mxu0
    %v1046 = vadd.f32 %v958, %v1045
    %v1047 = vpop.f32.mrf.mxu0
    %1048 = vdwg.mxu0
    %1049 = vst [vmem:[#allocation4] sm:$0xff] %v1019
    %1050 = vst [vmem:[#allocation4 + $0x8] sm:$0xff] %v1022
    %1051 = vst [vmem:[#allocation4 + $0x10] sm:$0xff] %v1027
    %1052 = vst [vmem:[#allocation4 + $0x18] sm:$0xff] %v1030
    %1053 = vst [vmem:[#allocation4 + $0x20] sm:$0xff] %v1035
    %1054 = vst [vmem:[#allocation4 + $0x28] sm:$0xff] %v1038
    %1055 = vst [vmem:[#allocation4 + $0x30] sm:$0xff] %v1043
    %1056 = vst [vmem:[#allocation4 + $0x38] sm:$0xff] %v1046
    // Predicated region
    $region94: #{tpu_custom_call.1} parent=1 // pred_check
      _
    $region95: #{tpu_custom_call.1} parent=1 // pred_check_branch
      %1058 = sbr.rel (0) target = $region97
    $region96: #{tpu_custom_call.1} parent=1 // pred_region
      %s1060 = ssub.s32 1024, 1024
      %1061 = vsyncadd [#allocation5], %s1060
      %s1062 = sshll.u32 [#allocation4], 4
      %s1063 = int_to_ptr.vmem [resolvable:$true] %s1062
      %1068 = dma.vmem_to_hbm [thread:$0]  %s1063, 1024, %s16, [#allocation5], 128, 128, 8
    $region97: #{tpu_custom_call.1} parent=1 // pred_fallthru
      _
    // Predicated region
    $region98: #{tpu_custom_call.1} parent=1 // pred_check
      _
    $region99: #{tpu_custom_call.1} parent=1 // pred_check_branch
      %1070 = sbr.rel (0) target = $region101
    $region100: #{tpu_custom_call.1} parent=1 // pred_region
      %1071 = dma.done [#allocation5], 1024
    $region101: #{tpu_custom_call.1} parent=1 // pred_fallthru
      _
    %1072 = vsyncpa [#allocation5], 1

</llo_original>
